<compile_context>
chip_gen: v6e
topology: v6e:2x2x1
jax: 0.10.0
libtpu: 0.0.40
codegen_flags: <defaults>
</compile_context>

<pallas_src>
import jax
import jax.numpy as jnp
from jax import lax
from jax.experimental import pallas as pl
from jax.experimental.pallas import tpu as pltpu

# ----------------------------- model config (args) ---------------------------
V = 20            # embed_num (vocab size)
D = 16            # embed_dim
C = 5             # class_num
CO = 8            # kernel_num
KS = (3, 4, 5)    # kernel_sizes
N = 4             # batch
W = 12            # sequence length

K_MAX = max(KS)                 # 5
T_PAD = 16                      # padded time rows per example (2 sublane tiles)
NT = N * T_PAD                  # 64 rows in the batched conv matmul
CO3 = len(KS) * CO              # 24 packed conv output channels
F_IN = CO3                      # fc1 input features
F_HID = F_IN // 2               # fc1 output features
LANES = 128                     # lane width used everywhere in the kernel
KV = K_MAX * V                  # 100 used rows of the folded emb*conv table
NEG = -1.0e9                    # large finite negative for the mask fold

# ----------------------------- slab row layout (all offsets 8-aligned) --------
R_EW = 0                        # folded emb @ conv weights : rows [0, 128)
R_MB = R_EW + LANES             # bias + validity mask       : rows [128, 192)
R_W12 = R_MB + NT               # folded fc1 @ fc2 weight    : rows [192, 320)
R_B12 = R_W12 + LANES           # folded fc bias (row 320)   : rows [320, 328)
R_TOTAL = R_B12 + 8             # 328


# ----------------------------- fused Pallas kernel ----------------------------
def fused_forward_kernel(tgt_ref, slab_ref, o_ref):
    """Entire MultiCNNText forward (embedding -> dual-channel conv -> ReLU ->
    max-pool-over-time -> fc1 -> fc2) on 128-lane-dense tiles.

    tgt_ref : (NT, 128) int32   lane target: tok[n,t+k]+k*V in segment k, -1 if invalid
    slab_ref: (328, 128) f32    packed constants (see row layout above)
    o_ref   : (N, 128) f32      logits in lanes [0, C), zeros elsewhere
    """
    # One full-vreg compare builds the combined one-hot for all K_MAX window offsets.
    lane = lax.broadcasted_iota(jnp.int32, (NT, LANES), 1)            # (64,128)
    onehot = (tgt_ref[...] == lane).astype(jnp.float32)               # (64,128)

    # Single 128-deep contraction = embedding gather + dual-channel conv for all Ks.
    acc = jnp.dot(onehot, slab_ref[R_EW:R_EW + LANES, :],
                  preferred_element_type=jnp.float32)                 # (64,128)

    # bias + validity mask folded into one additive tensor; ReLU zeroes masked rows.
    z = jnp.maximum(acc + slab_ref[R_MB:R_MB + NT, :], 0.0)           # (64,128)

    # max-pool over time: layout-trivial reshape (16 = 2 sublane tiles), one aligned
    # pairwise halving (pure VPU), then an in-tile sublane max.
    z3 = z.reshape(N, T_PAD, LANES)                                   # (4,16,128)
    half = jnp.maximum(z3[:, :T_PAD // 2, :], z3[:, T_PAD // 2:, :])  # (4,8,128)
    pooled = jnp.max(half, axis=1)                                    # (4,128)

    # folded fc1 -> fc2; single lane-dense store of the (4,128) logits.
    logits = jnp.dot(pooled, slab_ref[R_W12:R_W12 + LANES, :],
                     preferred_element_type=jnp.float32)              # (4,128)
    o_ref[...] = logits + slab_ref[R_B12:R_B12 + 1, :]


# ----------------------------- wrapper ----------------------------------------
def _token_targets(tokens):
    """(N, W) int32 -> (NT, 128) int32 lane-dense target table.

    Row n*T_PAD+t, lane l = k*V+v holds tokens[n, t+k] + k*V when t+k < W,
    and -1 (never matches a lane index) otherwise / in pad lanes."""
    pos = jnp.arange(T_PAD)[:, None] + jnp.arange(K_MAX)[None, :]     # (T_PAD, K_MAX)
    valid = pos < W
    gathered = tokens[:, jnp.where(valid, pos, 0)]                    # (N, T_PAD, K_MAX)
    tgt = jnp.where(valid[None, :, :],
                    gathered + (jnp.arange(K_MAX) * V)[None, None, :], -1)
    tgt = jnp.repeat(tgt, V, axis=2)                                  # (N, T_PAD, 100)
    tgt = jnp.pad(tgt, ((0, 0), (0, 0), (0, LANES - KV)), constant_values=-1)
    return tgt.reshape(NT, LANES).astype(jnp.int32)


@jax.jit
def multi_cnn_text_forward(tokens, packed):
    tgt = _token_targets(tokens)              # tiny int windowing, fused by XLA
    logits_pad = pl.pallas_call(
        fused_forward_kernel,
        out_shape=jax.ShapeDtypeStruct((N, LANES), jnp.float32),
        in_specs=[pl.BlockSpec(memory_space=pltpu.MemorySpace.VMEM),
                  pl.BlockSpec(memory_space=pltpu.MemorySpace.VMEM)],
        out_specs=pl.BlockSpec(memory_space=pltpu.MemorySpace.VMEM),
    )(tgt, packed["slab"])
    return logits_pad[:, :C]                  # lane-dense store in kernel, slice here


# ----------------------------- parameter packing ------------------------------
def pack_params(p):
    """Pack all constant operands into ONE (328, 128) f32 slab:
       rows [0,128)   : emb_cat @ conv_w folded table, row k*V+v, col j*CO+c
       rows [128,192) : conv bias where valid, -1e9 where masked (per (t, kernel-size))
       rows [192,320) : folded fc1^T @ fc2^T weight (24x5 in the top-left corner)
       row  320       : folded fc bias (lanes [0, C))
    """
    emb_cat = jnp.concatenate([p["embed"], p["static_embed"]], axis=1)   # (V, 2D)
    slab = jnp.zeros((R_TOTAL, LANES), jnp.float32)

    # folded embedding * conv weights
    for j, K in enumerate(KS):
        wt = p["conv_w"][j]                                    # PyTorch (Co, Ci=2, K, D)
        wflat = jnp.transpose(wt, (2, 1, 3, 0)).reshape(K, 2 * D, CO)    # (K, 2D, Co)
        for k in range(K):
            # x_emb[tok] @ w_k  ==  onehot(tok) @ (emb_cat @ w_k)
            slab = slab.at[R_EW + k * V:R_EW + (k + 1) * V,
                           j * CO:(j + 1) * CO].set(emb_cat @ wflat[k])

    # bias + validity mask folded into one additive tensor
    t = jnp.arange(T_PAD)[:, None]                                       # (T_PAD, 1)
    tlim = jnp.array([W - K + 1 for K in KS], jnp.int32)                 # (3,)
    valid = jnp.repeat(t < tlim[None, :], CO, axis=1)                    # (T_PAD, CO3)
    bias = jnp.concatenate([p["conv_b"][j] for j in range(len(KS))])     # (CO3,)
    mb = jnp.where(valid, bias[None, :], NEG)                            # (T_PAD, CO3)
    mb = jnp.pad(mb, ((0, 0), (0, LANES - CO3)), constant_values=NEG)    # (T_PAD, 128)
    slab = slab.at[R_MB:R_MB + NT, :].set(jnp.tile(mb, (N, 1)))          # (NT, 128)

    # fold fc1 -> fc2 (no nonlinearity between them in the module)
    w12 = p["fc1_w"].T @ p["fc2_w"].T                                    # (F_IN, C)
    b12 = p["fc1_b"] @ p["fc2_w"].T + p["fc2_b"]                         # (C,)
    slab = slab.at[R_W12:R_W12 + F_IN, :C].set(w12)
    slab = slab.at[R_B12, :C].set(b12)

    return {"slab": slab}


# ----------------------------- reference (pure JAX, raw params) ---------------
def reference_forward(tokens, p):
    er = p["embed"][tokens]                                   # (N, W, D)
    es = p["static_embed"][tokens]                            # (N, W, D)
    x = jnp.concatenate([er, es], axis=-1)                    # (N, W, 2D)
    pooled = []
    for j, K in enumerate(KS):
        wt = p["conv_w"][j]
        wflat = jnp.transpose(wt, (2, 1, 3, 0)).reshape(K, 2 * D, CO)
        T = W - K + 1
        acc = jnp.zeros((N, T, CO), jnp.float32)
        for k in range(K):
            acc = acc + jnp.einsum("ntd,dc->ntc", x[:, k:k + T, :], wflat[k])
        acc = jnp.maximum(acc + p["conv_b"][j][None, None, :], 0.0)
        pooled.append(jnp.max(acc, axis=1))
    feat = jnp.concatenate(pooled, axis=1)                    # (N, 3*Co)
    h = feat @ p["fc1_w"].T + p["fc1_b"]
    return h @ p["fc2_w"].T + p["fc2_b"]


# ----------------------------- parameter init (PyTorch layouts) ---------------
def init_params(key):
    n_keys = 2 + 2 * len(KS) + 4
    ks = jax.random.split(key, n_keys)
    p = {}
    p["embed"] = 0.1 * jax.random.normal(ks[0], (V, D), jnp.float32)
    p["static_embed"] = 0.1 * jax.random.normal(ks[1], (V, D), jnp.float32)

    conv_w, conv_b = [], []
    for j, K in enumerate(KS):
        conv_w.append(0.1 * jax.random.normal(ks[2 + 2 * j], (CO, 2, K, D), jnp.float32))
        conv_b.append(0.1 * jax.random.normal(ks[3 + 2 * j], (CO,), jnp.float32))
    p["conv_w"] = conv_w
    p["conv_b"] = conv_b

    # PyTorch Linear layout: weight (out, in), y = x @ W.T + b
    p["fc1_w"] = 0.1 * jax.random.normal(ks[-4], (F_HID, F_IN), jnp.float32)
    p["fc1_b"] = 0.1 * jax.random.normal(ks[-3], (F_HID,), jnp.float32)
    p["fc2_w"] = 0.1 * jax.random.normal(ks[-2], (C, F_HID), jnp.float32)
    p["fc2_b"] = 0.1 * jax.random.normal(ks[-1], (C,), jnp.float32)
    return p


# ----------------------------- main --------------------------------------------
if __name__ == "__main__":
    key = jax.random.PRNGKey(0)
    k_tok, k_par = jax.random.split(key)
    tokens = jax.random.randint(k_tok, (N, W), 0, V, dtype=jnp.int32)

    params = init_params(k_par)
    packed = pack_params(params)

    logits = multi_cnn_text_forward(tokens, packed)
    logits = jax.block_until_ready(logits)

    ref = reference_forward(tokens, params)
    assert logits.shape == (N, C), logits.shape
    assert jnp.allclose(logits, ref, atol=1e-3, rtol=1e-3), (logits, ref)

    print("KERNEL_OK")
</pallas_src>

<mosaic_0001>
module attributes {stable_mosaic.version = 11 : i64} {
  func.func @fused_forward_kernel(%arg0: memref<64x128xi32, #tpu.memory_space<vmem>>, %arg1: memref<328x128xf32, #tpu.memory_space<vmem>>, %arg2: memref<4x128xf32, #tpu.memory_space<vmem>>) attributes {dimension_semantics = [], scalar_prefetch = 0 : i64, scratch_operands = 0 : i64, tpu.core_type = #tpu.core_type<tc>} {
    %0 = tpu.iota {dimensions = array<i32: 1>} : vector<64x128xi32>
    %c0 = arith.constant 0 : index
    %c0_0 = arith.constant 0 : index
    %1 = vector.load %arg0[%c0, %c0_0] : memref<64x128xi32, #tpu.memory_space<vmem>>, vector<64x128xi32>
    %2 = arith.cmpi eq, %1, %0 : vector<64x128xi32>
    %3 = arith.extui %2 : vector<64x128xi1> to vector<64x128xi32>
    %4 = arith.sitofp %3 : vector<64x128xi32> to vector<64x128xf32>
    %c0_1 = arith.constant 0 : index
    %c0_2 = arith.constant 0 : index
    %5 = vector.load %arg1[%c0_1, %c0_2] : memref<328x128xf32, #tpu.memory_space<vmem>>, vector<128x128xf32>
    %cst = arith.constant dense<0.000000e+00> : vector<64x128xf32>
    %6 = tpu.matmul %4, %5, %cst {dimension_numbers = #tpu.dot_dimension_numbers<[1], [0], [0], [1], [0, 0, 1, 1], [], []>} : vector<64x128xf32>, vector<128x128xf32>, vector<64x128xf32> -> vector<64x128xf32>
    %c128 = arith.constant 128 : index
    %c0_3 = arith.constant 0 : index
    %7 = vector.load %arg1[%c128, %c0_3] : memref<328x128xf32, #tpu.memory_space<vmem>>, vector<64x128xf32>
    %8 = arith.addf %6, %7 : vector<64x128xf32>
    %cst_4 = arith.constant 0.000000e+00 : f32
    %9 = vector.broadcast %cst_4 : f32 to vector<64x128xf32>
    %10 = arith.maximumf %8, %9 : vector<64x128xf32>
    %11 = vector.shape_cast %10 : vector<64x128xf32> to vector<4x16x128xf32>
    %12 = vector.extract_strided_slice %11 {offsets = [0, 0, 0], sizes = [4, 8, 128], strides = [1, 1, 1]} : vector<4x16x128xf32> to vector<4x8x128xf32>
    %13 = vector.extract_strided_slice %11 {offsets = [0, 8, 0], sizes = [4, 8, 128], strides = [1, 1, 1]} : vector<4x16x128xf32> to vector<4x8x128xf32>
    %14 = arith.maximumf %12, %13 : vector<4x8x128xf32>
    %cst_5 = arith.constant dense<0xFF800000> : vector<4x128xf32>
    %15 = vector.multi_reduction <maximumf>, %14, %cst_5 [1] : vector<4x8x128xf32> to vector<4x128xf32>
    %c192 = arith.constant 192 : index
    %c0_6 = arith.constant 0 : index
    %16 = vector.load %arg1[%c192, %c0_6] : memref<328x128xf32, #tpu.memory_space<vmem>>, vector<128x128xf32>
    %cst_7 = arith.constant dense<0.000000e+00> : vector<4x128xf32>
    %17 = tpu.matmul %15, %16, %cst_7 {dimension_numbers = #tpu.dot_dimension_numbers<[1], [0], [0], [1], [0, 0, 1, 1], [], []>} : vector<4x128xf32>, vector<128x128xf32>, vector<4x128xf32> -> vector<4x128xf32>
    %c320 = arith.constant 320 : index
    %c0_8 = arith.constant 0 : index
    %18 = vector.load %arg1[%c320, %c0_8] : memref<328x128xf32, #tpu.memory_space<vmem>>, vector<1x128xf32>
    %19 = vector.broadcast %18 : vector<1x128xf32> to vector<4x128xf32>
    %20 = arith.addf %17, %19 : vector<4x128xf32>
    %c0_9 = arith.constant 0 : index
    %c0_10 = arith.constant 0 : index
    %21 = vector.load %arg2[%c0_9, %c0_10] : memref<4x128xf32, #tpu.memory_space<vmem>>, vector<4x128xf32>
    tpu.vector_store %arg2[%c0_9, %c0_10], %20 {strides = array<i32>} : memref<4x128xf32, #tpu.memory_space<vmem>>, vector<4x128xf32>,
    return
  }
}

</mosaic_0001>

<llo_original>
// kernel: multi_cnn_text_forward.1
$region0: #{multi_cnn_text_forward.1}
  #allocation0 [shape = 'u32[]', space=smem, size = 0x4, offset = 0x4, fixed_abs, tag = 'smem constant byte address 0x4 - core index']
  #allocation1 [shape = 'u32[144,128]{1,0:T(1,128)}', space=vmem, size = 0x12000, scoped, tag = 'internal scratch']
  %s0 = inlined_call_operand.vmem [shape: s32[64,128], index: 0, kind: input, shape index: {}]
  %s1 = inlined_call_operand.vmem [shape: f32[328,128], index: 1, kind: input, shape index: {}]
  %s2 = inlined_call_operand.hbm [shape: f32[4,128], index: 2, kind: output, shape index: {}]
  %s3 = sld [smem:[#allocation0]]
  $region18: #{multi_cnn_text_forward.1} parent=0
    _
  %s5 = ssub.s32 1, %s3
  %s6 = scalar_select 0, %s5, %s3
  $region1: #{multi_cnn_text_forward.1} parent=0
    #allocation2 [shape = 'u8[2048]{0}', space=vmem, size = 0x800, scoped, tag = 'output window, operand 0, single buffered']
    #allocation3 [shape = 's32[1]{0}', space=sflag, size = 0x4, scoped, tag = 'scoped memory for multi_cnn_text_forward.1']
    %7 = vsyncpa [#allocation3], 0
    // Predicated region
    $region2: #{multi_cnn_text_forward.1} parent=1 // pred_check
      _
    $region3: #{multi_cnn_text_forward.1} parent=1 // pred_check_branch
      %9 = sbr.rel (0) target = $region5
    $region4: #{multi_cnn_text_forward.1} parent=1 // pred_region
      _
    $region5: #{multi_cnn_text_forward.1} parent=1 // pred_fallthru
      _
    // Predicated region
    $region6: #{multi_cnn_text_forward.1} parent=1 // pred_check
      _
    $region7: #{multi_cnn_text_forward.1} parent=1 // pred_check_branch
      %11 = sbr.rel (0) target = $region9
    $region8: #{multi_cnn_text_forward.1} parent=1 // pred_region
      _
    $region9: #{multi_cnn_text_forward.1} parent=1 // pred_fallthru
      _
    %v12 = vlaneseq
    %v13 = vand.u32 %v12, 127
    %v14 = vld [vmem:[%s0] sm:$0xff]
    %v15 = vld [vmem:[%s0 + $0x8] sm:$0xff]
    %v16 = vld [vmem:[%s0 + $0x10] sm:$0xff]
    %v17 = vld [vmem:[%s0 + $0x18] sm:$0xff]
    %v18 = vld [vmem:[%s0 + $0x20] sm:$0xff]
    %v19 = vld [vmem:[%s0 + $0x28] sm:$0xff]
    %v20 = vld [vmem:[%s0 + $0x30] sm:$0xff]
    %v21 = vld [vmem:[%s0 + $0x38] sm:$0xff]
    %vm22 = vcmp.eq.s32.totalorder %v14, %v13
    %vm23 = vcmp.eq.s32.totalorder %v15, %v13
    %vm24 = vcmp.eq.s32.totalorder %v16, %v13
    %vm25 = vcmp.eq.s32.totalorder %v17, %v13
    %vm26 = vcmp.eq.s32.totalorder %v18, %v13
    %vm27 = vcmp.eq.s32.totalorder %v19, %v13
    %vm28 = vcmp.eq.s32.totalorder %v20, %v13
    %vm29 = vcmp.eq.s32.totalorder %v21, %v13
    %v30 = vsel %vm22, 1, 0
    %v31 = vsel %vm23, 1, 0
    %v32 = vsel %vm24, 1, 0
    %v33 = vsel %vm25, 1, 0
    %v34 = vsel %vm26, 1, 0
    %v35 = vsel %vm27, 1, 0
    %v36 = vsel %vm28, 1, 0
    %v37 = vsel %vm29, 1, 0
    %v38 = vcvt.s32.f32 %v30
    %v39 = vcvt.s32.f32 %v31
    %v40 = vcvt.s32.f32 %v32
    %v41 = vcvt.s32.f32 %v33
    %v42 = vcvt.s32.f32 %v34
    %v43 = vcvt.s32.f32 %v35
    %v44 = vcvt.s32.f32 %v36
    %v45 = vcvt.s32.f32 %v37
    %v46 = vld [vmem:[%s1] sm:$0xff]
    %v47 = vld [vmem:[%s1 + $0x8] sm:$0xff]
    %v48 = vld [vmem:[%s1 + $0x10] sm:$0xff]
    %v49 = vld [vmem:[%s1 + $0x18] sm:$0xff]
    %v50 = vld [vmem:[%s1 + $0x20] sm:$0xff]
    %v51 = vld [vmem:[%s1 + $0x28] sm:$0xff]
    %v52 = vld [vmem:[%s1 + $0x30] sm:$0xff]
    %v53 = vld [vmem:[%s1 + $0x38] sm:$0xff]
    %v54 = vld [vmem:[%s1 + $0x40] sm:$0xff]
    %v55 = vld [vmem:[%s1 + $0x48] sm:$0xff]
    %v56 = vld [vmem:[%s1 + $0x50] sm:$0xff]
    %v57 = vld [vmem:[%s1 + $0x58] sm:$0xff]
    %v58 = vld [vmem:[%s1 + $0x60] sm:$0xff]
    %v59 = vld [vmem:[%s1 + $0x68] sm:$0xff]
    %v60 = vld [vmem:[%s1 + $0x70] sm:$0xff]
    %v61 = vld [vmem:[%s1 + $0x78] sm:$0xff]
    %v62 = vld [vmem:[%s1 + $0x80] sm:$0xff]
    %v63 = vld [vmem:[%s1 + $0x88] sm:$0xff]
    %v64 = vld [vmem:[%s1 + $0x90] sm:$0xff]
    %v65 = vld [vmem:[%s1 + $0x98] sm:$0xff]
    %v66 = vld [vmem:[%s1 + $0xa0] sm:$0xff]
    %v67 = vld [vmem:[%s1 + $0xa8] sm:$0xff]
    %v68 = vld [vmem:[%s1 + $0xb0] sm:$0xff]
    %v69 = vld [vmem:[%s1 + $0xb8] sm:$0xff]
    %70 = vmatprep.subr.mxu0 0.0
    %71 = vmatpush1.msra.mxu0 %v61
    %72 = vmatprep.subr.mxu0 0.0
    %73 = vmatpush1.msra.mxu0 %v60
    %74 = vmatprep.subr.mxu0 0.0
    %75 = vmatpush1.msra.mxu0 %v59
    %76 = vmatprep.subr.mxu0 0.0
    %77 = vmatpush1.msra.mxu0 %v58
    %78 = vmatprep.subr.mxu0 0.0
    %79 = vmatpush1.msra.mxu0 %v57
    %80 = vmatprep.subr.mxu0 0.0
    %81 = vmatpush1.msra.mxu0 %v56
    %82 = vmatprep.subr.mxu0 0.0
    %83 = vmatpush1.msra.mxu0 %v55
    %84 = vmatprep.subr.mxu0 0.0
    %85 = vmatpush1.msra.mxu0 %v54
    %86 = vmatprep.subr.mxu0 0.0
    %87 = vmatpush1.msra.mxu0 %v53
    %88 = vmatprep.subr.mxu0 0.0
    %89 = vmatpush1.msra.mxu0 %v52
    %90 = vmatprep.subr.mxu0 0.0
    %91 = vmatpush1.msra.mxu0 %v51
    %92 = vmatprep.subr.mxu0 0.0
    %93 = vmatpush1.msra.mxu0 %v50
    %94 = vmatprep.subr.mxu0 0.0
    %95 = vmatpush1.msra.mxu0 %v49
    %96 = vmatprep.subr.mxu0 0.0
    %97 = vmatpush1.msra.mxu0 %v48
    %98 = vmatprep.subr.mxu0 0.0
    %99 = vmatpush1.msra.mxu0 %v47
    %100 = vmatprep.subr.mxu0 0.0
    %101 = vmatpush1.msra.mxu0 %v46
    %102 = vmatprep.subr.mxu0 0.0
    %103 = vmatpush2.msra.mxu0 0.0
    %104 = vmatprep.subr.mxu0 0.0
    %105 = vmatpush2.msra.mxu0 0.0
    %106 = vmatprep.subr.mxu0 0.0
    %107 = vmatpush2.msra.mxu0 0.0
    %108 = vmatprep.subr.mxu0 0.0
    %109 = vmatpush2.msra.mxu0 0.0
    %110 = vmatprep.subr.mxu0 0.0
    %111 = vmatpush2.msra.mxu0 0.0
    %112 = vmatprep.subr.mxu0 0.0
    %113 = vmatpush2.msra.mxu0 0.0
    %114 = vmatprep.subr.mxu0 0.0
    %115 = vmatpush2.msra.mxu0 0.0
    %116 = vmatprep.subr.mxu0 0.0
    %117 = vmatpush2.msra.mxu0 0.0
    %118 = vmatprep.subr.mxu0 0.0
    %119 = vmatpush2.msra.mxu0 0.0
    %120 = vmatprep.subr.mxu0 0.0
    %121 = vmatpush2.msra.mxu0 0.0
    %122 = vmatprep.subr.mxu0 0.0
    %123 = vmatpush2.msra.mxu0 0.0
    %124 = vmatprep.subr.mxu0 0.0
    %125 = vmatpush2.msra.mxu0 0.0
    %126 = vmatprep.subr.mxu0 0.0
    %127 = vmatpush2.msra.mxu0 0.0
    %128 = vmatprep.subr.mxu0 0.0
    %129 = vmatpush2.msra.mxu0 0.0
    %130 = vmatprep.subr.mxu0 0.0
    %131 = vmatpush2.msra.mxu0 0.0
    %132 = vmatprep.subr.mxu0 0.0
    %133 = vmatpush2.msra.mxu0 0.0
    %134 = vmatprep.mubr.f32.mxu0 0.0
    %135 = vmatmul.mubr.f32.gmra.mxu0 %v38
    %v136 = vpop.f32.mrf.mxu0
    %v137 = vadd.f32 %v62, %v136
    %v138 = vpop.f32.mrf.mxu0
    %139 = vmatprep.mubr.f32.mxu0 0.0
    %140 = vmatmul.mubr.f32.gmra.mxu0 %v39
    %v141 = vpop.f32.mrf.mxu0
    %v142 = vadd.f32 %v63, %v141
    %v143 = vpop.f32.mrf.mxu0
    %144 = vmatprep.mubr.f32.mxu0 0.0
    %145 = vmatmul.mubr.f32.gmra.mxu0 %v40
    %v146 = vpop.f32.mrf.mxu0
    %v147 = vadd.f32 %v64, %v146
    %v148 = vpop.f32.mrf.mxu0
    %149 = vmatprep.mubr.f32.mxu0 0.0
    %150 = vmatmul.mubr.f32.gmra.mxu0 %v41
    %v151 = vpop.f32.mrf.mxu0
    %v152 = vadd.f32 %v65, %v151
    %v153 = vpop.f32.mrf.mxu0
    %154 = vmatprep.mubr.f32.mxu0 0.0
    %155 = vmatmul.mubr.f32.gmra.mxu0 %v42
    %v156 = vpop.f32.mrf.mxu0
    %v157 = vadd.f32 %v66, %v156
    %v158 = vpop.f32.mrf.mxu0
    %159 = vmatprep.mubr.f32.mxu0 0.0
    %160 = vmatmul.mubr.f32.gmra.mxu0 %v43
    %v161 = vpop.f32.mrf.mxu0
    %v162 = vadd.f32 %v67, %v161
    %v163 = vpop.f32.mrf.mxu0
    %164 = vmatprep.mubr.f32.mxu0 0.0
    %165 = vmatmul.mubr.f32.gmra.mxu0 %v44
    %v166 = vpop.f32.mrf.mxu0
    %v167 = vadd.f32 %v68, %v166
    %v168 = vpop.f32.mrf.mxu0
    %169 = vmatprep.mubr.f32.mxu0 0.0
    %170 = vmatmul.mubr.f32.gmra.mxu0 %v45
    %v171 = vpop.f32.mrf.mxu0
    %v172 = vadd.f32 %v69, %v171
    %v173 = vpop.f32.mrf.mxu0
    %174 = vdwg.mxu0
    %v175 = vmax.f32 %v137, 0.0
    %v176 = vmax.f32 %v142, 0.0
    %v177 = vmax.f32 %v147, 0.0
    %v178 = vmax.f32 %v152, 0.0
    %v179 = vmax.f32 %v157, 0.0
    %v180 = vmax.f32 %v162, 0.0
    %v181 = vmax.f32 %v167, 0.0
    %v182 = vmax.f32 %v172, 0.0
    %v183 = vmax.f32 %v175, %v176
    %v184 = vmax.f32 %v177, %v178
    %v185 = vmax.f32 %v179, %v180
    %v186 = vmax.f32 %v181, %v182
    %v187 = vrot.slane %v183, 4
    %v188 = vmax.f32 %v183, %v187
    %v189 = vrot.slane %v188, 2
    %v190 = vmax.f32 %v188, %v189
    %v191 = vrot.slane %v190, 1
    %v192 = vmax.f32 %v190, %v191
    %v193 = vrot.slane %v184, 4
    %v194 = vmax.f32 %v184, %v193
    %v195 = vrot.slane %v194, 2
    %v196 = vmax.f32 %v194, %v195
    %v197 = vrot.slane %v196, 1
    %v198 = vmax.f32 %v196, %v197
    %v199 = vrot.slane %v185, 4
    %v200 = vmax.f32 %v185, %v199
    %v201 = vrot.slane %v200, 2
    %v202 = vmax.f32 %v200, %v201
    %v203 = vrot.slane %v202, 1
    %v204 = vmax.f32 %v202, %v203
    %v205 = vrot.slane %v186, 4
    %v206 = vmax.f32 %v186, %v205
    %v207 = vrot.slane %v206, 2
    %v208 = vmax.f32 %v206, %v207
    %v209 = vrot.slane %v208, 1
    %v210 = vmax.f32 %v208, %v209
    %v211 = vld [vmem:[%s1 + $0xc0] sm:$0xff]
    %v212 = vld [vmem:[%s1 + $0xc8] sm:$0xff]
    %v213 = vld [vmem:[%s1 + $0xd0] sm:$0xff]
    %v214 = vld [vmem:[%s1 + $0xd8] sm:$0xff]
    %v215 = vld [vmem:[%s1 + $0xe0] sm:$0xff]
    %v216 = vld [vmem:[%s1 + $0xe8] sm:$0xff]
    %v217 = vld [vmem:[%s1 + $0xf0] sm:$0xff]
    %v218 = vld [vmem:[%s1 + $0xf8] sm:$0xff]
    %v219 = vld [vmem:[%s1 + $0x100] sm:$0xff]
    %v220 = vld [vmem:[%s1 + $0x108] sm:$0xff]
    %v221 = vld [vmem:[%s1 + $0x110] sm:$0xff]
    %v222 = vld [vmem:[%s1 + $0x118] sm:$0xff]
    %v223 = vld [vmem:[%s1 + $0x120] sm:$0xff]
    %v224 = vld [vmem:[%s1 + $0x128] sm:$0xff]
    %v225 = vld [vmem:[%s1 + $0x130] sm:$0xff]
    %v226 = vld [vmem:[%s1 + $0x138] sm:$0xff]
    %v227 = vld [vmem:[%s1 + $0x140] sm:$0x1]
    %v228 = vlaneseq
    %v229 = vshrl.u32 %v228, 7
    %v230 = vsub.s32 0, %v229
    %v231 = vrot.slane %v227, %v230
    %vm236 = vcmask 1041409
    %v237 = vsel %vm236, %v198, %v192
    %vm238 = vcmask 1042434
    %v239 = vsel %vm238, %v204, %v237
    %vm240 = vcmask 1043459
    %v241 = vsel %vm240, %v210, %v239
    %243 = vmatprep.subr.mxu0 0.0
    %244 = vmatpush1.msra.mxu0 %v226
    %245 = vmatprep.subr.mxu0 0.0
    %246 = vmatpush1.msra.mxu0 %v225
    %247 = vmatprep.subr.mxu0 0.0
    %248 = vmatpush1.msra.mxu0 %v224
    %249 = vmatprep.subr.mxu0 0.0
    %250 = vmatpush1.msra.mxu0 %v223
    %251 = vmatprep.subr.mxu0 0.0
    %252 = vmatpush1.msra.mxu0 %v222
    %253 = vmatprep.subr.mxu0 0.0
    %254 = vmatpush1.msra.mxu0 %v221
    %255 = vmatprep.subr.mxu0 0.0
    %256 = vmatpush1.msra.mxu0 %v220
    %257 = vmatprep.subr.mxu0 0.0
    %258 = vmatpush1.msra.mxu0 %v219
    %259 = vmatprep.subr.mxu0 0.0
    %260 = vmatpush1.msra.mxu0 %v218
    %261 = vmatprep.subr.mxu0 0.0
    %262 = vmatpush1.msra.mxu0 %v217
    %263 = vmatprep.subr.mxu0 0.0
    %264 = vmatpush1.msra.mxu0 %v216
    %265 = vmatprep.subr.mxu0 0.0
    %266 = vmatpush1.msra.mxu0 %v215
    %267 = vmatprep.subr.mxu0 0.0
    %268 = vmatpush1.msra.mxu0 %v214
    %269 = vmatprep.subr.mxu0 0.0
    %270 = vmatpush1.msra.mxu0 %v213
    %271 = vmatprep.subr.mxu0 0.0
    %272 = vmatpush1.msra.mxu0 %v212
    %273 = vmatprep.subr.mxu0 0.0
    %274 = vmatpush1.msra.mxu0 %v211
    %275 = vmatprep.subr.mxu0 0.0
    %276 = vmatpush2.msra.mxu0 0.0
    %277 = vmatprep.subr.mxu0 0.0
    %278 = vmatpush2.msra.mxu0 0.0
    %279 = vmatprep.subr.mxu0 0.0
    %280 = vmatpush2.msra.mxu0 0.0
    %281 = vmatprep.subr.mxu0 0.0
    %282 = vmatpush2.msra.mxu0 0.0
    %283 = vmatprep.subr.mxu0 0.0
    %284 = vmatpush2.msra.mxu0 0.0
    %285 = vmatprep.subr.mxu0 0.0
    %286 = vmatpush2.msra.mxu0 0.0
    %287 = vmatprep.subr.mxu0 0.0
    %288 = vmatpush2.msra.mxu0 0.0
    %289 = vmatprep.subr.mxu0 0.0
    %290 = vmatpush2.msra.mxu0 0.0
    %291 = vmatprep.subr.mxu0 0.0
    %292 = vmatpush2.msra.mxu0 0.0
    %293 = vmatprep.subr.mxu0 0.0
    %294 = vmatpush2.msra.mxu0 0.0
    %295 = vmatprep.subr.mxu0 0.0
    %296 = vmatpush2.msra.mxu0 0.0
    %297 = vmatprep.subr.mxu0 0.0
    %298 = vmatpush2.msra.mxu0 0.0
    %299 = vmatprep.subr.mxu0 0.0
    %300 = vmatpush2.msra.mxu0 0.0
    %301 = vmatprep.subr.mxu0 0.0
    %302 = vmatpush2.msra.mxu0 0.0
    %303 = vmatprep.subr.mxu0 0.0
    %304 = vmatpush2.msra.mxu0 0.0
    %305 = vmatprep.subr.mxu0 0.0
    %306 = vmatpush2.msra.mxu0 0.0
    %307 = vmatprep.mubr.f32.mxu0 0.0
    %308 = vmatmul.mubr.f32.gmra.mxu0 %v241
    %v309 = vpop.f32.mrf.mxu0
    %v310 = vadd.f32 %v231, %v309
    %v311 = vpop.f32.mrf.mxu0
    %312 = vdwg.mxu0
    %313 = vst [vmem:[#allocation2] sm:$0xf] %v310
    // Predicated region
    $region10: #{multi_cnn_text_forward.1} parent=1 // pred_check
      _
    $region11: #{multi_cnn_text_forward.1} parent=1 // pred_check_branch
      %315 = sbr.rel (0) target = $region13
    $region12: #{multi_cnn_text_forward.1} parent=1 // pred_region
      %s317 = ssub.s32 64, 64
      %318 = vsyncadd [#allocation3], %s317
      %s320 = sshll.u32 [#allocation2], 4
      %s321 = int_to_ptr.vmem [resolvable:$true] %s320
      %323 = dma.vmem_to_hbm [thread:$0]  %s321, 64, %s2, [#allocation3]
    $region13: #{multi_cnn_text_forward.1} parent=1 // pred_fallthru
      _
    // Predicated region
    $region14: #{multi_cnn_text_forward.1} parent=1 // pred_check
      _
    $region15: #{multi_cnn_text_forward.1} parent=1 // pred_check_branch
      %325 = sbr.rel (0) target = $region17
    $region16: #{multi_cnn_text_forward.1} parent=1 // pred_region
      %326 = dma.done [#allocation3], 64
    $region17: #{multi_cnn_text_forward.1} parent=1 // pred_fallthru
      _
    %327 = vsyncpa [#allocation3], 1

</llo_original>
